<compile_context>
chip_gen: v7x
topology: tpu7x:2x2x1
jax: 0.10.0
libtpu: 0.0.40
codegen_flags: <defaults>
</compile_context>

<pallas_src>
import math

import jax
import jax.numpy as jnp
from jax.experimental import pallas as pl
from jax.experimental.pallas import tpu as pltpu


def _device_tuning():
    """Return (x-tile target bytes, scoped-VMEM limit, split grid 2-way)."""
    try:
        kind = jax.devices()[0].device_kind.lower()
    except Exception:
        kind = ""
    if "v5" in kind or "v6" in kind:
        # Single TensorCore, 128 MiB physical VMEM: fewer, bigger tiles; no split.
        return 8 * 1024 * 1024, 64 * 1024 * 1024, False
    # v7x (64 MiB VMEM, 2 TCs) or unknown/interpret: conservative tiles + 2-way split.
    return 2 * 1024 * 1024, 32 * 1024 * 1024, True


def _make_kernel(seq_len, ts, need_mask):
    def kernel(x_ref, w_ref, o_ref, m_ref, l_ref, acc_ref):
        # x_ref block: (TB, TS, H); w_ref: (1, H); o_ref: (TB, H)
        s_idx = pl.program_id(1)

        @pl.when(s_idx == 0)
        def _init():
            m_ref[...] = jnp.full_like(m_ref, -jnp.inf)
            l_ref[...] = jnp.zeros_like(l_ref)
            acc_ref[...] = jnp.zeros_like(acc_ref)

        x = x_ref[...]                                  # (TB, TS, H), storage dtype
        w = w_ref[...].astype(x.dtype)                  # (1, H)

        if need_mask:
            # Last sequence chunk straddles S: zero padded columns so garbage
            # (possibly NaN) memory cannot leak into valid rows.
            col = s_idx * ts + jax.lax.broadcasted_iota(
                jnp.int32, (x.shape[0], x.shape[1]), 1)          # (TB, TS)
            valid = col < seq_len
            x = jnp.where(valid[:, :, None], x, jnp.zeros_like(x))

        # attention_score = x @ w : VPU multiply + lane reduce, f32 accumulate.
        # Lane-dense (TB, TS) layout for all the softmax math.
        scores = jnp.sum((x * w[None, :, :]).astype(jnp.float32), axis=-1)

        if need_mask:
            scores = jnp.where(valid, scores, -jnp.inf)

        # Online softmax across the sequence-chunk grid axis.
        m_prev = m_ref[...]                                            # (TB, 1)
        m_new = jnp.maximum(m_prev, jnp.max(scores, axis=-1, keepdims=True))
        alpha = jnp.exp(m_prev - m_new)                                # (TB, 1)
        p = jnp.exp(scores - m_new)                                    # (TB, TS)
        l_ref[...] = alpha * l_ref[...] + jnp.sum(p, axis=-1, keepdims=True)
        weighted = (x * p.astype(x.dtype)[:, :, None]).astype(jnp.float32)
        acc_ref[...] = alpha * acc_ref[...] + jnp.sum(weighted, axis=1)  # (TB, H)
        m_ref[...] = m_new

        @pl.when(s_idx == pl.num_programs(1) - 1)
        def _finalize():
            # Exact divide: approx reciprocal was outside the 1e-3 tolerance.
            o_ref[...] = (acc_ref[...] / l_ref[...]).astype(o_ref.dtype)

    return kernel


def simple_self_attention(x, attention_w, *, target_tile_bytes=None,
                          vmem_limit_bytes=None):
    """Pallas implementation of SimpleSelfAttention.forward.

    x:            (B, S, H)
    attention_w:  (H, 1)   (PyTorch parameter layout)
    returns:      (B, H)
    """
    B, S, H = x.shape
    itemsize = jnp.dtype(x.dtype).itemsize
    # Sublane tile of the storage dtype: 8 for f32, 16 for bf16, 32 for int8/fp8.
    sublane = 8 * max(1, 4 // itemsize)

    auto_tile, auto_vmem, split_two_way = _device_tuning()
    if target_tile_bytes is None:
        target_tile_bytes = auto_tile
    if vmem_limit_bytes is None:
        vmem_limit_bytes = auto_vmem

    w_row = attention_w.reshape(1, H)  # lane-major layout for broadcasting

    row_bytes = S * H * itemsize  # one batch row at full sequence length
    if sublane * row_bytes <= target_tile_bytes:
        # Batch-tiled, full sequence per block.
        ts = S
        tb = (target_tile_bytes // row_bytes) // sublane * sublane
        if tb >= B:
            tb = B
            if split_two_way and B >= 2 * sublane:
                # Balanced 2-way split so both v7x TensorCores get work.
                tb = ((pl.cdiv(B, 2) + sublane - 1) // sublane) * sublane
    else:
        # Long rows: minimal batch tile and chunk the sequence axis; the
        # online-softmax accumulators keep the live set bounded.
        tb = B if B < sublane else sublane
        ts = max(sublane,
                 (target_tile_bytes // (tb * H * itemsize)) // sublane * sublane)
        if ts >= S:
            ts = S

    grid = (pl.cdiv(B, tb), pl.cdiv(S, ts))
    need_mask = (S % ts) != 0

    cost = pl.CostEstimate(
        flops=4 * B * S * H,
        transcendentals=B * S,
        bytes_accessed=itemsize * (B * S * H + B * H + H),
    )

    kernel = _make_kernel(S, ts, need_mask)

    return pl.pallas_call(
        kernel,
        out_shape=jax.ShapeDtypeStruct((B, H), x.dtype),
        grid_spec=pltpu.PrefetchScalarGridSpec(
            num_scalar_prefetch=0,
            grid=grid,
            in_specs=[
                pl.BlockSpec((tb, ts, H), lambda b, s: (b, s, 0)),
                pl.BlockSpec((1, H), lambda b, s: (0, 0)),
            ],
            out_specs=pl.BlockSpec((tb, H), lambda b, s: (b, 0)),
            scratch_shapes=[
                pltpu.VMEM((tb, 1), jnp.float32),   # running max
                pltpu.VMEM((tb, 1), jnp.float32),   # running denominator
                pltpu.VMEM((tb, H), jnp.float32),   # running weighted sum
            ],
        ),
        compiler_params=pltpu.CompilerParams(
            dimension_semantics=("parallel", "arbitrary"),
            vmem_limit_bytes=vmem_limit_bytes,
        ),
        cost_estimate=cost,
    )(x, w_row)


def _reference(x, w):
    scores = jnp.matmul(x, w)[..., 0]                     # (B, S)
    p = jax.nn.softmax(scores, axis=1)[..., None]         # (B, S, 1)
    return jnp.sum(x * p, axis=1)                         # (B, H)


if __name__ == "__main__":
    # --- Test 1: small shapes matching the module (batch=2, seq=8, hidden=32) ---
    B, S, H = 2, 8, 32
    key = jax.random.PRNGKey(0)
    kx, kw = jax.random.split(key)
    x = jax.random.normal(kx, (B, S, H), dtype=jnp.float32)

    # Deterministic xavier_normal_-style init for the (H, 1) parameter:
    # std = sqrt(2 / (fan_in + fan_out)) = sqrt(2 / (H + 1))
    std = math.sqrt(2.0 / (H + 1))
    attention_w = std * jax.random.normal(kw, (H, 1), dtype=jnp.float32)

    out = jax.block_until_ready(simple_self_attention(x, attention_w))
    ref = _reference(x, attention_w)
    assert out.shape == (B, H)
    assert jnp.allclose(out, ref, atol=1e-3, rtol=1e-3), (
        f"max err {jnp.max(jnp.abs(out - ref))}"
    )

    # --- Test 2: ragged batch tile + sequence chunking/masking + online softmax ---
    B2, S2, H2 = 13, 20, 128
    kx2, kw2 = jax.random.split(jax.random.PRNGKey(1))
    x2 = jax.random.normal(kx2, (B2, S2, H2), dtype=jnp.float32)
    w2 = math.sqrt(2.0 / (H2 + 1)) * jax.random.normal(
        kw2, (H2, 1), dtype=jnp.float32
    )
    out2 = jax.block_until_ready(
        simple_self_attention(x2, w2, target_tile_bytes=8 * 1024)
    )
    ref2 = _reference(x2, w2)
    assert out2.shape == (B2, H2)
    assert jnp.allclose(out2, ref2, atol=1e-3, rtol=1e-3), (
        f"max err {jnp.max(jnp.abs(out2 - ref2))}"
    )

    print("KERNEL_OK")
</pallas_src>

<mosaic_0001>
module attributes {stable_mosaic.version = 11 : i64} {
  func.func @kernel(%arg0: i32, %arg1: i32, %arg2: memref<2x8x32xf32, #tpu.memory_space<vmem>>, %arg3: memref<1x32xf32, #tpu.memory_space<vmem>>, %arg4: memref<2x32xf32, #tpu.memory_space<vmem>>, %arg5: memref<2x1xf32, #tpu.memory_space<vmem>>, %arg6: memref<2x1xf32, #tpu.memory_space<vmem>>, %arg7: memref<2x32xf32, #tpu.memory_space<vmem>>) attributes {dimension_semantics = [#tpu.dimension_semantics<parallel>, #tpu.dimension_semantics<arbitrary>], iteration_bounds = array<i64: 1, 1>, scalar_prefetch = 0 : i64, scratch_operands = 3 : i64, tpu.core_type = #tpu.core_type<tc>, window_params = [{transform_indices = @transform_0, window_bounds = array<i64: 2, 8, 32>}, {pipeline_mode = #tpu.pipeline_mode<synchronous>, transform_indices = @transform_1, window_bounds = array<i64: 1, 32>}, {transform_indices = @transform_2, window_bounds = array<i64: 2, 32>}]} {
    %c0_i32 = arith.constant 0 : i32
    %0 = arith.cmpi eq, %arg1, %c0_i32 : i32
    %1 = arith.extui %0 : i1 to i32
    %c0_i32_0 = arith.constant 0 : i32
    %2 = arith.cmpi ne, %1, %c0_i32_0 : i32
    scf.if %2 {
      %cst_22 = arith.constant 0xFF800000 : f32
      %37 = vector.broadcast %cst_22 : f32 to vector<2x1xf32>
      %c0_23 = arith.constant 0 : index
      %c0_24 = arith.constant 0 : index
      %38 = vector.load %arg5[%c0_23, %c0_24] : memref<2x1xf32, #tpu.memory_space<vmem>>, vector<2x1xf32>
      tpu.vector_store %arg5[%c0_23, %c0_24], %37 {strides = array<i32>} : memref<2x1xf32, #tpu.memory_space<vmem>>, vector<2x1xf32>,
      %cst_25 = arith.constant 0.000000e+00 : f32
      %39 = vector.broadcast %cst_25 : f32 to vector<2x1xf32>
      %c0_26 = arith.constant 0 : index
      %c0_27 = arith.constant 0 : index
      %40 = vector.load %arg6[%c0_26, %c0_27] : memref<2x1xf32, #tpu.memory_space<vmem>>, vector<2x1xf32>
      tpu.vector_store %arg6[%c0_26, %c0_27], %39 {strides = array<i32>} : memref<2x1xf32, #tpu.memory_space<vmem>>, vector<2x1xf32>,
      %cst_28 = arith.constant 0.000000e+00 : f32
      %41 = vector.broadcast %cst_28 : f32 to vector<2x32xf32>
      %c0_29 = arith.constant 0 : index
      %c0_30 = arith.constant 0 : index
      %42 = vector.load %arg7[%c0_29, %c0_30] : memref<2x32xf32, #tpu.memory_space<vmem>>, vector<2x32xf32>
      tpu.vector_store %arg7[%c0_29, %c0_30], %41 {strides = array<i32>} : memref<2x32xf32, #tpu.memory_space<vmem>>, vector<2x32xf32>,
    } else {
    }
    %c0 = arith.constant 0 : index
    %c0_1 = arith.constant 0 : index
    %c0_2 = arith.constant 0 : index
    %3 = vector.load %arg2[%c0, %c0_1, %c0_2] : memref<2x8x32xf32, #tpu.memory_space<vmem>>, vector<2x8x32xf32>
    %c0_3 = arith.constant 0 : index
    %c0_4 = arith.constant 0 : index
    %4 = vector.load %arg3[%c0_3, %c0_4] : memref<1x32xf32, #tpu.memory_space<vmem>>, vector<1x32xf32>
    %5 = vector.shape_cast %4 : vector<1x32xf32> to vector<1x1x32xf32>
    %6 = vector.broadcast %5 : vector<1x1x32xf32> to vector<2x8x32xf32>
    %7 = arith.mulf %3, %6 : vector<2x8x32xf32>
    %cst = arith.constant dense<0.000000e+00> : vector<2x8xf32>
    %8 = vector.multi_reduction <add>, %7, %cst [2] : vector<2x8x32xf32> to vector<2x8xf32>
    %c0_5 = arith.constant 0 : index
    %c0_6 = arith.constant 0 : index
    %9 = vector.load %arg5[%c0_5, %c0_6] : memref<2x1xf32, #tpu.memory_space<vmem>>, vector<2x1xf32>
    %cst_7 = arith.constant dense<0xFF800000> : vector<2xf32>
    %10 = vector.multi_reduction <maximumf>, %8, %cst_7 [1] : vector<2x8xf32> to vector<2xf32>
    %11 = vector.shape_cast %10 : vector<2xf32> to vector<2x1xf32>
    %12 = arith.maximumf %9, %11 : vector<2x1xf32>
    %13 = arith.subf %9, %12 : vector<2x1xf32>
    %14 = math.exp %13 : vector<2x1xf32>
    %15 = vector.broadcast %12 : vector<2x1xf32> to vector<2x8xf32>
    %16 = arith.subf %8, %15 : vector<2x8xf32>
    %17 = math.exp %16 : vector<2x8xf32>
    %c0_8 = arith.constant 0 : index
    %c0_9 = arith.constant 0 : index
    %18 = vector.load %arg6[%c0_8, %c0_9] : memref<2x1xf32, #tpu.memory_space<vmem>>, vector<2x1xf32>
    %19 = arith.mulf %14, %18 : vector<2x1xf32>
    %cst_10 = arith.constant dense<0.000000e+00> : vector<2xf32>
    %20 = vector.multi_reduction <add>, %17, %cst_10 [1] : vector<2x8xf32> to vector<2xf32>
    %21 = vector.shape_cast %20 : vector<2xf32> to vector<2x1xf32>
    %22 = arith.addf %19, %21 : vector<2x1xf32>
    %c0_11 = arith.constant 0 : index
    %c0_12 = arith.constant 0 : index
    %23 = vector.load %arg6[%c0_11, %c0_12] : memref<2x1xf32, #tpu.memory_space<vmem>>, vector<2x1xf32>
    tpu.vector_store %arg6[%c0_11, %c0_12], %22 {strides = array<i32>} : memref<2x1xf32, #tpu.memory_space<vmem>>, vector<2x1xf32>,
    %24 = vector.shape_cast %17 : vector<2x8xf32> to vector<2x8x1xf32>
    %25 = vector.broadcast %24 : vector<2x8x1xf32> to vector<2x8x32xf32>
    %26 = arith.mulf %3, %25 : vector<2x8x32xf32>
    %c0_13 = arith.constant 0 : index
    %c0_14 = arith.constant 0 : index
    %27 = vector.load %arg7[%c0_13, %c0_14] : memref<2x32xf32, #tpu.memory_space<vmem>>, vector<2x32xf32>
    %28 = vector.broadcast %14 : vector<2x1xf32> to vector<2x32xf32>
    %29 = arith.mulf %28, %27 : vector<2x32xf32>
    %cst_15 = arith.constant dense<0.000000e+00> : vector<2x32xf32>
    %30 = vector.multi_reduction <add>, %26, %cst_15 [1] : vector<2x8x32xf32> to vector<2x32xf32>
    %31 = arith.addf %29, %30 : vector<2x32xf32>
    %c0_16 = arith.constant 0 : index
    %c0_17 = arith.constant 0 : index
    %32 = vector.load %arg7[%c0_16, %c0_17] : memref<2x32xf32, #tpu.memory_space<vmem>>, vector<2x32xf32>
    tpu.vector_store %arg7[%c0_16, %c0_17], %31 {strides = array<i32>} : memref<2x32xf32, #tpu.memory_space<vmem>>, vector<2x32xf32>,
    %c0_18 = arith.constant 0 : index
    %c0_19 = arith.constant 0 : index
    %33 = vector.load %arg5[%c0_18, %c0_19] : memref<2x1xf32, #tpu.memory_space<vmem>>, vector<2x1xf32>
    tpu.vector_store %arg5[%c0_18, %c0_19], %12 {strides = array<i32>} : memref<2x1xf32, #tpu.memory_space<vmem>>, vector<2x1xf32>,
    %c0_i32_20 = arith.constant 0 : i32
    %34 = arith.cmpi eq, %arg1, %c0_i32_20 : i32
    %35 = arith.extui %34 : i1 to i32
    %c0_i32_21 = arith.constant 0 : i32
    %36 = arith.cmpi ne, %35, %c0_i32_21 : i32
    scf.if %36 {
      %c0_22 = arith.constant 0 : index
      %c0_23 = arith.constant 0 : index
      %37 = vector.load %arg7[%c0_22, %c0_23] : memref<2x32xf32, #tpu.memory_space<vmem>>, vector<2x32xf32>
      %c0_24 = arith.constant 0 : index
      %c0_25 = arith.constant 0 : index
      %38 = vector.load %arg6[%c0_24, %c0_25] : memref<2x1xf32, #tpu.memory_space<vmem>>, vector<2x1xf32>
      %39 = vector.broadcast %38 : vector<2x1xf32> to vector<2x32xf32>
      %40 = arith.divf %37, %39 : vector<2x32xf32>
      %c0_26 = arith.constant 0 : index
      %c0_27 = arith.constant 0 : index
      %41 = vector.load %arg4[%c0_26, %c0_27] : memref<2x32xf32, #tpu.memory_space<vmem>>, vector<2x32xf32>
      tpu.vector_store %arg4[%c0_26, %c0_27], %40 {strides = array<i32>} : memref<2x32xf32, #tpu.memory_space<vmem>>, vector<2x32xf32>,
    } else {
    }
    return
  }
  func.func @transform_0(%arg0: i32, %arg1: i32) -> (i32, i32, i32) {
    %c0_i32 = arith.constant 0 : i32
    %c0_i32_0 = arith.constant 0 : i32
    return %arg0, %arg1, %c0_i32 : i32, i32, i32
  }
  func.func @transform_1(%arg0: i32, %arg1: i32) -> (i32, i32) {
    %c0_i32 = arith.constant 0 : i32
    %c0_i32_0 = arith.constant 0 : i32
    %c0_i32_1 = arith.constant 0 : i32
    return %c0_i32, %c0_i32_0 : i32, i32
  }
  func.func @transform_2(%arg0: i32, %arg1: i32) -> (i32, i32) {
    %c0_i32 = arith.constant 0 : i32
    %c0_i32_0 = arith.constant 0 : i32
    return %arg0, %c0_i32 : i32, i32
  }
}

</mosaic_0001>

<llo_original>
// kernel: tpu_custom_call.1
$region0: #{tpu_custom_call.1}
  #allocation0 [shape = 'u32[]', space=smem, size = 0x4, offset = 0x4, fixed_abs, tag = 'smem constant byte address 0x4 - core index']
  #allocation1 [shape = 'u32[144,128]{1,0:T(1,128)}', space=vmem, size = 0x12000, scoped, tag = 'internal scratch']
  #allocation2 [shape = 'f32[2,1]{1,0:T(2,128)}', space=vmem, size = 0x400, scoped, tag = 'scratch operand']
  #allocation3 [shape = 'f32[2,1]{1,0:T(2,128)}', space=vmem, size = 0x400, scoped, tag = 'scratch operand']
  #allocation4 [shape = 'f32[2,32]{1,0:T(2,128)}', space=vmem, size = 0x400, scoped, tag = 'scratch operand']
  %s0 = inlined_call_operand.hbm [shape: f32[2,8,32], index: 0, kind: input, shape index: {}]
  %s1 = inlined_call_operand.vmem [shape: f32[1,32], index: 1, kind: input, shape index: {}]
  %s2 = inlined_call_operand.hbm [shape: f32[2,32], index: 2, kind: output, shape index: {}]
  %s3 = sld [smem:[#allocation0]]
  $region30: #{tpu_custom_call.1} parent=0
    _
  %s5 = ssub.s32 1, %s3
  %s6 = scalar_select 0, %s5, %s3
  $region1: #{tpu_custom_call.1} parent=0
    #allocation5 [shape = 'u8[8192]{0}', space=vmem, size = 0x2000, scoped, tag = 'input window, operand 0, single buffered']
    #allocation6 [shape = 's32[1]{0}', space=sflag, size = 0x4, scoped, tag = 'scoped memory for tpu_custom_call.1']
    #allocation7 [shape = 's32[1]{0}', space=sflag, size = 0x4, scoped, tag = 'scoped memory for tpu_custom_call.1']
    #allocation8 [shape = 'u8[1024]{0}', space=vmem, size = 0x400, scoped, tag = 'output window, operand 0, single buffered']
    %7 = vsyncpa [#allocation6], 0
    %8 = vsyncpa [#allocation7], 0
    // Predicated region
    $region2: #{tpu_custom_call.1} parent=1 // pred_check
      _
    $region3: #{tpu_custom_call.1} parent=1 // pred_check_branch
      %10 = sbr.rel (0) target = $region5
    $region4: #{tpu_custom_call.1} parent=1 // pred_region
      %s12 = ssub.s32 256, 256
      %13 = vsyncadd [#allocation6], %s12
      %s14 = sshll.u32 [#allocation5], 4
      %s15 = int_to_ptr.vmem [resolvable:$true] %s14
      %20 = dma.hbm_to_vmem [thread:$0]  %s0, 256, %s15, [#allocation6], 128, 128, 8
    $region5: #{tpu_custom_call.1} parent=1 // pred_fallthru
      _
    // Predicated region
    $region6: #{tpu_custom_call.1} parent=1 // pred_check
      _
    $region7: #{tpu_custom_call.1} parent=1 // pred_check_branch
      %22 = sbr.rel (0) target = $region9
    $region8: #{tpu_custom_call.1} parent=1 // pred_region
      _
    $region9: #{tpu_custom_call.1} parent=1 // pred_fallthru
      _
    // Predicated region
    $region10: #{tpu_custom_call.1} parent=1 // pred_check
      _
    $region11: #{tpu_custom_call.1} parent=1 // pred_check_branch
      %24 = sbr.rel (0) target = $region13
    $region12: #{tpu_custom_call.1} parent=1 // pred_region
      %25 = dma.done [#allocation6], 256
    $region13: #{tpu_custom_call.1} parent=1 // pred_fallthru
      _
    %p26 = scmp.eq.s32.totalorder 0, 0
    // Predicated region
    $region14: #{tpu_custom_call.1} parent=1 // pred_check
      %p27 = pneg %p26
    $region15: #{tpu_custom_call.1} parent=1 // pred_check_branch
      %29 = sbr.rel (%p27) target = $region17
    $region16: #{tpu_custom_call.1} parent=1 // pred_region
      %vm30 = vcmask 1024
      %31 = vst.msk [vmem:[#allocation2] sm:$0x3] %vm30, -inf
      %32 = vst.msk [vmem:[#allocation3] sm:$0x3] %vm30, 0.0
      %vm33 = vcmask 254976
      %34 = vst.msk [vmem:[#allocation4] sm:$0x3] %vm33, 0.0
    $region17: #{tpu_custom_call.1} parent=1 // pred_fallthru
      _
    %v35 = vld [vmem:[#allocation5] sm:$0xff]
    %v36 = vld [vmem:[#allocation5 + $0x8] sm:$0xff]
    %v37 = vld [vmem:[%s1] sm:$0x1]
    %v39 = vlaneseq
    %v40 = vshrl.u32 %v39, 7
    %v41 = vsub.s32 0, %v40
    %v42 = vrot.slane %v37, %v41
    %v44 = vmul.f32 %v35, %v42
    %v45 = vmul.f32 %v36, %v42
    %vm46 = vcmask 261120
    %v47 = vsel %vm46, %v44, 0.0
    %48 = vadd.xlane.f32.xlu0 %v47
    %v49 = vpop.xlane.xlu0 %48
    %v50 = vsel %vm46, %v45, 0.0
    %51 = vadd.xlane.f32.xlu0 %v50
    %v52 = vpop.xlane.xlu0 %51
    %v53 = vld [vmem:[#allocation2] sm:$0x3]
    %v56 = vlaneseq
    %v57 = vand.u32 %v56, 127
    %v58 = vlaneseq
    %v59 = vshrl.u32 %v58, 7
    %v60 = vsub.s32 %v57, %v59
    %v61 = vrot.slane %v49, %v60
    %v62 = vlaneseq
    %v63 = vshrl.u32 %v62, 7
    %v64 = vsub.s32 %v57, %v63
    %v65 = vrot.slane %v52, %v64
    %vm66 = vcmask 1041409
    %v67 = vsel %vm66, %v65, %v61
    %vm69 = vcmask 58368
    %v70 = vsel %vm69, %v67, -inf
    %71 = vmax.xlane.f32.xlu0 %v70
    %v72 = vpop.xlane.xlu0 %71
    %v73 = vmax.f32 %v53, %v72
    %v74 = vsub.f32 %v53, %v73
    %v75 = vmul.f32 %v74, 1.442695
    %v76 = vpow.pop %v75
    %78 = vset.pattern.permute.xlu0 0
    %79 = vperm.xlu0 %78, %v73
    %v80 = vpop.permute.xlu0 %79
    %v81 = vlaneseq
    %v82 = vshrl.u32 %v81, 7
    %v83 = vsub.s32 0, %v82
    %v84 = vrot.slane %v80, %v83
    %v85 = vlaneseq
    %v86 = vshrl.u32 %v85, 7
    %v87 = vsub.s32 1, %v86
    %v88 = vrot.slane %v80, %v87
    %v91 = vsub.f32 %v49, %v84
    %v92 = vsub.f32 %v52, %v88
    %v93 = vmul.f32 %v91, 1.442695
    %v94 = vpow.pop %v93
    %v95 = vmul.f32 %v92, 1.442695
    %v96 = vpow.pop %v95
    %v97 = vld [vmem:[#allocation3] sm:$0x3]
    %v98 = vmul.f32 %v76, %v97
    %101 = vset.pattern.permute.xlu0 0
    %102 = vperm.xlu0 %101, %v94
    %v103 = vpop.permute.xlu0 %102
    %104 = vset.pattern.permute.xlu0 0
    %105 = vperm.xlu0 %104, %v96
    %v106 = vpop.permute.xlu0 %105
    %v107 = vlaneseq
    %v108 = vshrl.u32 %v107, 7
    %v109 = vsub.s32 %v57, %v108
    %v110 = vrot.slane %v103, %v109
    %v111 = vlaneseq
    %v112 = vshrl.u32 %v111, 7
    %v113 = vsub.s32 %v57, %v112
    %v114 = vrot.slane %v106, %v113
    %v115 = vsel %vm66, %v114, %v110
    %v117 = vsel %vm69, %v115, 0.0
    %118 = vadd.xlane.f32.xlu0 %v117
    %v119 = vpop.xlane.xlu0 %118
    %v120 = vadd.f32 %v98, %v119
    %vm121 = vcmask 1024
    %122 = vst.msk [vmem:[#allocation3] sm:$0x3] %vm121, %v120
    %v125 = vmul.f32 %v35, %v103
    %v126 = vmul.f32 %v36, %v106
    %v127 = vld [vmem:[#allocation4] sm:$0x3]
    %129 = vset.pattern.permute.xlu0 0
    %130 = vperm.xlu0 %129, %v76
    %v131 = vpop.permute.xlu0 %130
    %v133 = vmul.f32 %v131, %v127
    %v134 = vsel %vm46, %v125, 0.0
    %v135 = vrot.slane %v134, 4
    %v136 = vadd.f32 %v134, %v135
    %v137 = vrot.slane %v136, 2
    %v138 = vadd.f32 %v136, %v137
    %v139 = vrot.slane %v138, 1
    %v140 = vadd.f32 %v138, %v139
    %v141 = vsel %vm46, %v126, 0.0
    %v142 = vrot.slane %v141, 4
    %v143 = vadd.f32 %v141, %v142
    %v144 = vrot.slane %v143, 2
    %v145 = vadd.f32 %v143, %v144
    %v146 = vrot.slane %v145, 1
    %v147 = vadd.f32 %v145, %v146
    %v150 = vsel %vm66, %v147, %v140
    %v152 = vadd.f32 %v133, %v150
    %vm153 = vcmask 254976
    %154 = vst.msk [vmem:[#allocation4] sm:$0x3] %vm153, %v152
    %155 = vst.msk [vmem:[#allocation2] sm:$0x3] %vm121, %v73
    // Predicated region
    $region18: #{tpu_custom_call.1} parent=1 // pred_check
      %p156 = pneg %p26
    $region19: #{tpu_custom_call.1} parent=1 // pred_check_branch
      %158 = sbr.rel (%p156) target = $region21
    $region20: #{tpu_custom_call.1} parent=1 // pred_region
      %v159 = vld [vmem:[#allocation4] sm:$0x3]
      %v160 = vld [vmem:[#allocation3] sm:$0x3]
      %162 = vset.pattern.permute.xlu0 0
      %163 = vperm.xlu0 %162, %v160
      %v164 = vpop.permute.xlu0 %163
      %v166 = vrcp.pop %v164
      %v167 = vmul.f32 %v159, %v166
      %168 = vst.msk [vmem:[#allocation8] sm:$0x3] %vm153, %v167
    $region21: #{tpu_custom_call.1} parent=1 // pred_fallthru
      _
    // Predicated region
    $region22: #{tpu_custom_call.1} parent=1 // pred_check
      _
    $region23: #{tpu_custom_call.1} parent=1 // pred_check_branch
      %170 = sbr.rel (0) target = $region25
    $region24: #{tpu_custom_call.1} parent=1 // pred_region
      %s172 = ssub.s32 32, 32
      %173 = vsyncadd [#allocation7], %s172
      %s175 = sshll.u32 [#allocation8], 4
      %s176 = int_to_ptr.vmem [resolvable:$true] %s175
      %178 = dma.vmem_to_hbm [thread:$0]  %s176, 32, %s2, [#allocation7]
    $region25: #{tpu_custom_call.1} parent=1 // pred_fallthru
      _
    // Predicated region
    $region26: #{tpu_custom_call.1} parent=1 // pred_check
      _
    $region27: #{tpu_custom_call.1} parent=1 // pred_check_branch
      %180 = sbr.rel (0) target = $region29
    $region28: #{tpu_custom_call.1} parent=1 // pred_region
      %181 = dma.done [#allocation7], 32
    $region29: #{tpu_custom_call.1} parent=1 // pred_fallthru
      _
    %182 = vsyncpa [#allocation6], 1
    %183 = vsyncpa [#allocation7], 1

</llo_original>
